<compile_context>
chip_gen: v5e
topology: v5e:2x2
jax: 0.10.0
libtpu: 0.0.40
codegen_flags: <defaults>
</compile_context>

<pallas_src>
import functools
import numpy as np

import jax
import jax.numpy as jnp
from jax import lax
from jax.experimental import pallas as pl
from jax.experimental.pallas import tpu as pltpu

EXPANSION = 4
BN_EPS = 1e-5


# ----------------------------------------------------------------------------
# Pallas kernel
# ----------------------------------------------------------------------------
def _decimate(a, C, H, W, stride):
    """Spatially decimate a channels-first flattened (C, H*W) map by `stride`."""
    Hout = (H - 1) // stride + 1
    Wout = (W - 1) // stride + 1
    a = a.reshape(C, H, W)[:, ::stride, ::stride]
    return a.reshape(C, Hout * Wout)


def _bottleneck_kernel(x_ref, masks_ref, w1_ref, b1_ref, w2_ref, b2_ref,
                       w3d_ref, b3d_ref, o_ref, *, H, W, stride):
    Cin, HW = x_ref.shape[1], x_ref.shape[2]
    P = w1_ref.shape[0]
    has_downsample = (w3d_ref.shape[1] != P)            # static (shape-derived)

    x = x_ref[0]                                         # (Cin, H*W) f32
    xb = x.astype(jnp.bfloat16)

    # ---- conv1 (1x1) + bn1 (folded) + relu --------------------------------
    h1 = jnp.dot(w1_ref[...], xb, preferred_element_type=jnp.float32)
    h1 = jnp.maximum(h1 + b1_ref[...], 0.0)              # (P, H*W) f32

    # ---- conv2 (3x3, pad=1, stride) + bn2 (folded) + relu -----------------
    # im2col along K.  Each tap t[(y,x)] = h1[(y+dh, x+dw)] is a lane-shifted
    # copy of h1.  Zero padding of (W+1) lanes on each side removes the row
    # wrap for dh = +-1.  The column wrap for dw = +-1 is removed by zeroing
    # the SOURCE column that would wrap in (col W-1 for dw=-1, col 0 for
    # dw=+1) -- those source columns are never legitimately read by that tap,
    # so one mask multiply per direction suffices for all three dh values.
    h1b = h1.astype(jnp.bfloat16)
    masks = masks_ref[...]                               # (2, H*W) bf16, {0,1}
    src = {
        -1: h1b * masks[0:1, :],                         # col W-1 zeroed
        0: h1b,
        1: h1b * masks[1:2, :],                          # col 0 zeroed
    }
    zpad = jnp.zeros((P, W + 1), jnp.bfloat16)
    padded = {dw: jnp.concatenate([zpad, src[dw], zpad], axis=1)
              for dw in (-1, 0, 1)}                      # (P, H*W + 2W + 2)

    taps = []
    for dh in (-1, 0, 1):
        for dw in (-1, 0, 1):
            start = (W + 1) + dh * W + dw                # static slice start
            taps.append(padded[dw][:, start:start + HW])
    im2col = jnp.concatenate(taps, axis=0)               # (9P, H*W) bf16

    h2 = jnp.dot(w2_ref[...], im2col, preferred_element_type=jnp.float32)
    h2 = jnp.maximum(h2 + b2_ref[...], 0.0)              # (P, H*W) f32

    if stride == 1:
        xs = x
    else:
        h2 = _decimate(h2, P, H, W, stride)
        xs = _decimate(x, Cin, H, W, stride)

    # ---- conv3 (1x1) + bn3, fused with downsample 1x1 + bn, + add + relu --
    if has_downsample:
        rhs = jnp.concatenate([h2, xs], axis=0).astype(jnp.bfloat16)
        out = jnp.dot(w3d_ref[...], rhs, preferred_element_type=jnp.float32)
        out = out + b3d_ref[...]
    else:
        # Identity shortcut: skip the downsample matmul entirely.
        out = jnp.dot(w3d_ref[...], h2.astype(jnp.bfloat16),
                      preferred_element_type=jnp.float32)
        out = out + b3d_ref[...] + xs

    o_ref[...] = jnp.maximum(out, 0.0)[None, :, :]


# ----------------------------------------------------------------------------
# Parameter construction (deterministic) and BN folding (glue, plain JAX).
# ----------------------------------------------------------------------------
def init_params(key, in_planes, planes):
    C4 = EXPANSION * planes
    ks = list(jax.random.split(key, 8))

    def conv_w(k, cout, cin, kh, kw):
        fan_in = cin * kh * kw
        return jax.random.normal(k, (cout, cin, kh, kw), jnp.float32) / np.sqrt(fan_in)

    def bn_p(k, c):
        k1, k2, k3, k4 = jax.random.split(k, 4)
        gamma = 1.0 + 0.1 * jax.random.normal(k1, (c,), jnp.float32)
        beta = 0.1 * jax.random.normal(k2, (c,), jnp.float32)
        mean = 0.1 * jax.random.normal(k3, (c,), jnp.float32)
        var = jax.random.uniform(k4, (c,), jnp.float32, 0.5, 1.5)
        return (gamma, beta, mean, var)

    return dict(
        conv1=conv_w(ks[0], planes, in_planes, 1, 1), bn1=bn_p(ks[1], planes),
        conv2=conv_w(ks[2], planes, planes, 3, 3),    bn2=bn_p(ks[3], planes),
        conv3=conv_w(ks[4], C4, planes, 1, 1),        bn3=bn_p(ks[5], C4),
        convd=conv_w(ks[6], C4, in_planes, 1, 1),     bnd=bn_p(ks[7], C4),
    )


def _fold_bn(bn):
    gamma, beta, mean, var = bn
    scale = gamma / jnp.sqrt(var + BN_EPS)
    return scale, beta - mean * scale


def make_kernel_inputs(params, in_planes, planes, stride):
    """Fold eval-mode BN into the conv weights; emit bf16 matmul-form tensors."""
    P, C4 = planes, EXPANSION * planes

    s1, b1 = _fold_bn(params['bn1'])
    w1 = (params['conv1'][:, :, 0, 0] * s1[:, None]).astype(jnp.bfloat16)  # (P, Cin)

    s2, b2 = _fold_bn(params['bn2'])
    # (P, P, 3, 3) -> (3, 3, P, P) -> (9P, P) -> (P, 9P) with columns ordered
    # [(kh*3 + kw)*P + cin], matching the in-kernel tap stacking order.
    w2 = jnp.transpose(params['conv2'], (2, 3, 1, 0)).reshape(9 * P, P).T
    w2 = (w2 * s2[:, None]).astype(jnp.bfloat16)                           # (P, 9P)

    s3, b3 = _fold_bn(params['bn3'])
    w3 = params['conv3'][:, :, 0, 0] * s3[:, None]                         # (C4, P)

    if stride != 1 or in_planes != C4:
        sd, bd = _fold_bn(params['bnd'])
        wd = params['convd'][:, :, 0, 0] * sd[:, None]                     # (C4, Cin)
        w3d = jnp.concatenate([w3, wd], axis=1).astype(jnp.bfloat16)       # (C4, P+Cin)
        b3d = b3 + bd
    else:
        w3d = w3.astype(jnp.bfloat16)            # identity shortcut: no wd matmul
        b3d = b3
    return (w1, b1[:, None], w2, b2[:, None], w3d, b3d[:, None])


# ----------------------------------------------------------------------------
# pallas_call wrapper (NCHW in, NCHW out — only free contiguous reshapes).
# ----------------------------------------------------------------------------
@functools.partial(jax.jit, static_argnames=('stride',))
def bottleneck_forward(x_nchw, kernel_inputs, stride=1):
    w1, b1, w2, b2, w3d, b3d = kernel_inputs
    N, Cin, H, W = x_nchw.shape
    C4 = w3d.shape[0]
    Hout = (H - 1) // stride + 1
    Wout = (W - 1) // stride + 1
    HW, HWo = H * W, Hout * Wout

    # NCHW -> (N, C, H*W) is a free reshape of contiguous memory.
    x = x_nchw.reshape(N, Cin, HW).astype(jnp.float32)

    # Source-column validity masks for the dw = -1 / +1 taps of the 3x3 conv:
    #   row 0: keep cols <= W-2  (source for dw = -1 taps)
    #   row 1: keep cols >= 1    (source for dw = +1 taps)
    col = jnp.tile(jnp.arange(W, dtype=jnp.int32), H)
    src_masks = jnp.stack([(col <= W - 2), (col >= 1)]).astype(jnp.bfloat16)  # (2, HW)

    kernel = functools.partial(_bottleneck_kernel, H=H, W=W, stride=stride)

    def full(a):
        zeros = (0,) * a.ndim
        return pl.BlockSpec(a.shape, lambda n, _z=zeros: _z)

    out = pl.pallas_call(
        kernel,
        out_shape=jax.ShapeDtypeStruct((N, C4, HWo), jnp.float32),
        grid_spec=pltpu.PrefetchScalarGridSpec(
            num_scalar_prefetch=0,
            grid=(N,),
            in_specs=[
                pl.BlockSpec((1, Cin, HW), lambda n: (n, 0, 0)),
                full(src_masks),
                full(w1), full(b1), full(w2), full(b2), full(w3d), full(b3d),
            ],
            out_specs=pl.BlockSpec((1, C4, HWo), lambda n: (n, 0, 0)),
        ),
        compiler_params=pltpu.CompilerParams(dimension_semantics=("parallel",)),
    )(x, src_masks, w1, b1, w2, b2, w3d, b3d)
    return out.reshape(N, C4, Hout, Wout)


# ----------------------------------------------------------------------------
# Pure-JAX reference (independent path through lax.conv) for validation.
# ----------------------------------------------------------------------------
def ref_forward(x_nchw, params, in_planes, planes, stride):
    x = jnp.transpose(x_nchw, (0, 2, 3, 1))

    def conv(y, w, s=1, pad='VALID'):
        wh = jnp.transpose(w, (2, 3, 1, 0))  # OIHW -> HWIO
        return lax.conv_general_dilated(y, wh, (s, s), pad,
                                        dimension_numbers=('NHWC', 'HWIO', 'NHWC'))

    def bn(y, p):
        gamma, beta, mean, var = p
        return (y - mean) * gamma / jnp.sqrt(var + BN_EPS) + beta

    out = jax.nn.relu(bn(conv(x, params['conv1']), params['bn1']))
    out = jax.nn.relu(bn(conv(out, params['conv2'], stride, ((1, 1), (1, 1))), params['bn2']))
    out = bn(conv(out, params['conv3']), params['bn3'])
    if stride != 1 or in_planes != EXPANSION * planes:
        sc = bn(conv(x, params['convd'], stride), params['bnd'])
    else:
        sc = x
    out = jax.nn.relu(out + sc)
    return jnp.transpose(out, (0, 3, 1, 2))


if __name__ == "__main__":
    key = jax.random.PRNGKey(0)
    k1, k2, k3, k4 = jax.random.split(key, 4)
    N, H, W = 2, 16, 16

    # Case 1: projection shortcut (1x1 conv + BN on the skip path).
    in_planes, planes, stride = 16, 8, 1
    x = jax.random.normal(k1, (N, in_planes, H, W), jnp.float32)   # NCHW like PyTorch
    params = init_params(k2, in_planes, planes)
    ki = make_kernel_inputs(params, in_planes, planes, stride)
    out = jax.block_until_ready(bottleneck_forward(x, ki, stride=stride))
    ref = ref_forward(x, params, in_planes, planes, stride)
    assert out.shape == (N, EXPANSION * planes, H, W)
    np.testing.assert_allclose(np.asarray(out), np.asarray(ref), rtol=5e-2, atol=5e-2)

    # Case 2: identity shortcut (in_planes == expansion*planes, stride == 1):
    # the kernel statically skips the downsample matmul.
    in_planes, planes, stride = 32, 8, 1
    x = jax.random.normal(k3, (N, in_planes, H, W), jnp.float32)
    params = init_params(k4, in_planes, planes)
    ki = make_kernel_inputs(params, in_planes, planes, stride)
    out = jax.block_until_ready(bottleneck_forward(x, ki, stride=stride))
    ref = ref_forward(x, params, in_planes, planes, stride)
    np.testing.assert_allclose(np.asarray(out), np.asarray(ref), rtol=5e-2, atol=5e-2)

    print("KERNEL_OK")
</pallas_src>

<mosaic_0001>
module attributes {stable_mosaic.version = 11 : i64} {
  func.func @_bottleneck_kernel(%arg0: i32, %arg1: memref<1x16x256xf32, #tpu.memory_space<vmem>>, %arg2: memref<2x256xbf16, #tpu.memory_space<vmem>>, %arg3: memref<8x16xbf16, #tpu.memory_space<vmem>>, %arg4: memref<8x1xf32, #tpu.memory_space<vmem>>, %arg5: memref<8x72xbf16, #tpu.memory_space<vmem>>, %arg6: memref<8x1xf32, #tpu.memory_space<vmem>>, %arg7: memref<32x24xbf16, #tpu.memory_space<vmem>>, %arg8: memref<32x1xf32, #tpu.memory_space<vmem>>, %arg9: memref<1x32x256xf32, #tpu.memory_space<vmem>>) attributes {dimension_semantics = [#tpu.dimension_semantics<parallel>], iteration_bounds = array<i64: 2>, scalar_prefetch = 0 : i64, scratch_operands = 0 : i64, tpu.core_type = #tpu.core_type<tc>, window_params = [{transform_indices = @transform_0, window_bounds = array<i64: 1, 16, 256>}, {pipeline_mode = #tpu.pipeline_mode<synchronous>, transform_indices = @transform_1, window_bounds = array<i64: 2, 256>}, {pipeline_mode = #tpu.pipeline_mode<synchronous>, transform_indices = @transform_2, window_bounds = array<i64: 8, 16>}, {pipeline_mode = #tpu.pipeline_mode<synchronous>, transform_indices = @transform_3, window_bounds = array<i64: 8, 1>}, {pipeline_mode = #tpu.pipeline_mode<synchronous>, transform_indices = @transform_4, window_bounds = array<i64: 8, 72>}, {pipeline_mode = #tpu.pipeline_mode<synchronous>, transform_indices = @transform_5, window_bounds = array<i64: 8, 1>}, {pipeline_mode = #tpu.pipeline_mode<synchronous>, transform_indices = @transform_6, window_bounds = array<i64: 32, 24>}, {pipeline_mode = #tpu.pipeline_mode<synchronous>, transform_indices = @transform_7, window_bounds = array<i64: 32, 1>}, {transform_indices = @transform_8, window_bounds = array<i64: 1, 32, 256>}]} {
    %c0 = arith.constant 0 : index
    %c0_0 = arith.constant 0 : index
    %c0_1 = arith.constant 0 : index
    %0 = vector.load %arg1[%c0, %c0_0, %c0_1] : memref<1x16x256xf32, #tpu.memory_space<vmem>>, vector<1x16x256xf32>
    %1 = vector.shape_cast %0 : vector<1x16x256xf32> to vector<16x256xf32>
    %2 = arith.truncf %1 : vector<16x256xf32> to vector<16x256xbf16>
    %c0_2 = arith.constant 0 : index
    %c0_3 = arith.constant 0 : index
    %3 = vector.load %arg3[%c0_2, %c0_3] : memref<8x16xbf16, #tpu.memory_space<vmem>>, vector<8x16xbf16>
    %cst = arith.constant dense<0.000000e+00> : vector<8x256xf32>
    %4 = tpu.matmul %3, %2, %cst {dimension_numbers = #tpu.dot_dimension_numbers<[1], [0], [0], [1], [0, 0, 1, 1], [], []>} : vector<8x16xbf16>, vector<16x256xbf16>, vector<8x256xf32> -> vector<8x256xf32>
    %c0_4 = arith.constant 0 : index
    %c0_5 = arith.constant 0 : index
    %5 = vector.load %arg4[%c0_4, %c0_5] : memref<8x1xf32, #tpu.memory_space<vmem>>, vector<8x1xf32>
    %6 = vector.broadcast %5 : vector<8x1xf32> to vector<8x256xf32>
    %7 = arith.addf %4, %6 : vector<8x256xf32>
    %cst_6 = arith.constant 0.000000e+00 : f32
    %8 = vector.broadcast %cst_6 : f32 to vector<8x256xf32>
    %9 = arith.maximumf %7, %8 : vector<8x256xf32>
    %10 = arith.truncf %9 : vector<8x256xf32> to vector<8x256xbf16>
    %c0_7 = arith.constant 0 : index
    %c0_8 = arith.constant 0 : index
    %11 = vector.load %arg2[%c0_7, %c0_8] : memref<2x256xbf16, #tpu.memory_space<vmem>>, vector<2x256xbf16>
    %12 = vector.extract_strided_slice %11 {offsets = [0, 0], sizes = [1, 256], strides = [1, 1]} : vector<2x256xbf16> to vector<1x256xbf16>
    %13 = vector.broadcast %12 : vector<1x256xbf16> to vector<8x256xbf16>
    %14 = arith.mulf %10, %13 : vector<8x256xbf16>
    %15 = vector.extract_strided_slice %11 {offsets = [1, 0], sizes = [1, 256], strides = [1, 1]} : vector<2x256xbf16> to vector<1x256xbf16>
    %16 = vector.broadcast %15 : vector<1x256xbf16> to vector<8x256xbf16>
    %17 = arith.mulf %10, %16 : vector<8x256xbf16>
    %cst_9 = arith.constant 0.000000e+00 : bf16
    %18 = vector.broadcast %cst_9 : bf16 to vector<8x17xbf16>
    %19 = tpu.concatenate %18, %14, %18 in 1 : vector<8x17xbf16>, vector<8x256xbf16>, vector<8x17xbf16> -> vector<8x290xbf16>
    %20 = tpu.concatenate %18, %10, %18 in 1 : vector<8x17xbf16>, vector<8x256xbf16>, vector<8x17xbf16> -> vector<8x290xbf16>
    %21 = tpu.concatenate %18, %17, %18 in 1 : vector<8x17xbf16>, vector<8x256xbf16>, vector<8x17xbf16> -> vector<8x290xbf16>
    %22 = vector.extract_strided_slice %19 {offsets = [0, 0], sizes = [8, 256], strides = [1, 1]} : vector<8x290xbf16> to vector<8x256xbf16>
    %23 = vector.extract_strided_slice %20 {offsets = [0, 1], sizes = [8, 256], strides = [1, 1]} : vector<8x290xbf16> to vector<8x256xbf16>
    %24 = vector.extract_strided_slice %21 {offsets = [0, 2], sizes = [8, 256], strides = [1, 1]} : vector<8x290xbf16> to vector<8x256xbf16>
    %25 = vector.extract_strided_slice %19 {offsets = [0, 16], sizes = [8, 256], strides = [1, 1]} : vector<8x290xbf16> to vector<8x256xbf16>
    %26 = vector.extract_strided_slice %20 {offsets = [0, 17], sizes = [8, 256], strides = [1, 1]} : vector<8x290xbf16> to vector<8x256xbf16>
    %27 = vector.extract_strided_slice %21 {offsets = [0, 18], sizes = [8, 256], strides = [1, 1]} : vector<8x290xbf16> to vector<8x256xbf16>
    %28 = vector.extract_strided_slice %19 {offsets = [0, 32], sizes = [8, 256], strides = [1, 1]} : vector<8x290xbf16> to vector<8x256xbf16>
    %29 = vector.extract_strided_slice %20 {offsets = [0, 33], sizes = [8, 256], strides = [1, 1]} : vector<8x290xbf16> to vector<8x256xbf16>
    %30 = vector.extract_strided_slice %21 {offsets = [0, 34], sizes = [8, 256], strides = [1, 1]} : vector<8x290xbf16> to vector<8x256xbf16>
    %31 = tpu.concatenate %22, %23, %24, %25, %26, %27, %28, %29, %30 in 0 : vector<8x256xbf16>, vector<8x256xbf16>, vector<8x256xbf16>, vector<8x256xbf16>, vector<8x256xbf16>, vector<8x256xbf16>, vector<8x256xbf16>, vector<8x256xbf16>, vector<8x256xbf16> -> vector<72x256xbf16>
    %c0_10 = arith.constant 0 : index
    %c0_11 = arith.constant 0 : index
    %32 = vector.load %arg5[%c0_10, %c0_11] : memref<8x72xbf16, #tpu.memory_space<vmem>>, vector<8x72xbf16>
    %cst_12 = arith.constant dense<0.000000e+00> : vector<8x256xf32>
    %33 = tpu.matmul %32, %31, %cst_12 {dimension_numbers = #tpu.dot_dimension_numbers<[1], [0], [0], [1], [0, 0, 1, 1], [], []>} : vector<8x72xbf16>, vector<72x256xbf16>, vector<8x256xf32> -> vector<8x256xf32>
    %c0_13 = arith.constant 0 : index
    %c0_14 = arith.constant 0 : index
    %34 = vector.load %arg6[%c0_13, %c0_14] : memref<8x1xf32, #tpu.memory_space<vmem>>, vector<8x1xf32>
    %35 = vector.broadcast %34 : vector<8x1xf32> to vector<8x256xf32>
    %36 = arith.addf %33, %35 : vector<8x256xf32>
    %cst_15 = arith.constant 0.000000e+00 : f32
    %37 = vector.broadcast %cst_15 : f32 to vector<8x256xf32>
    %38 = arith.maximumf %36, %37 : vector<8x256xf32>
    %39 = tpu.concatenate %38, %1 in 0 : vector<8x256xf32>, vector<16x256xf32> -> vector<24x256xf32>
    %40 = arith.truncf %39 : vector<24x256xf32> to vector<24x256xbf16>
    %c0_16 = arith.constant 0 : index
    %c0_17 = arith.constant 0 : index
    %41 = vector.load %arg7[%c0_16, %c0_17] : memref<32x24xbf16, #tpu.memory_space<vmem>>, vector<32x24xbf16>
    %cst_18 = arith.constant dense<0.000000e+00> : vector<32x256xf32>
    %42 = tpu.matmul %41, %40, %cst_18 {dimension_numbers = #tpu.dot_dimension_numbers<[1], [0], [0], [1], [0, 0, 1, 1], [], []>} : vector<32x24xbf16>, vector<24x256xbf16>, vector<32x256xf32> -> vector<32x256xf32>
    %c0_19 = arith.constant 0 : index
    %c0_20 = arith.constant 0 : index
    %43 = vector.load %arg8[%c0_19, %c0_20] : memref<32x1xf32, #tpu.memory_space<vmem>>, vector<32x1xf32>
    %44 = vector.broadcast %43 : vector<32x1xf32> to vector<32x256xf32>
    %45 = arith.addf %42, %44 : vector<32x256xf32>
    %cst_21 = arith.constant 0.000000e+00 : f32
    %46 = vector.broadcast %cst_21 : f32 to vector<32x256xf32>
    %47 = arith.maximumf %45, %46 : vector<32x256xf32>
    %48 = vector.shape_cast %47 : vector<32x256xf32> to vector<1x32x256xf32>
    %c0_22 = arith.constant 0 : index
    %c0_23 = arith.constant 0 : index
    %c0_24 = arith.constant 0 : index
    %49 = vector.load %arg9[%c0_22, %c0_23, %c0_24] : memref<1x32x256xf32, #tpu.memory_space<vmem>>, vector<1x32x256xf32>
    tpu.vector_store %arg9[%c0_22, %c0_23, %c0_24], %48 {strides = array<i32>} : memref<1x32x256xf32, #tpu.memory_space<vmem>>, vector<1x32x256xf32>,
    return
  }
  func.func @transform_0(%arg0: i32) -> (i32, i32, i32) {
    %c0_i32 = arith.constant 0 : i32
    %c0_i32_0 = arith.constant 0 : i32
    %c0_i32_1 = arith.constant 0 : i32
    return %arg0, %c0_i32, %c0_i32_0 : i32, i32, i32
  }
  func.func @transform_1(%arg0: i32) -> (i32, i32) {
    %c0_i32 = arith.constant 0 : i32
    %c0_i32_0 = arith.constant 0 : i32
    %c0_i32_1 = arith.constant 0 : i32
    return %c0_i32, %c0_i32_0 : i32, i32
  }
  func.func @transform_2(%arg0: i32) -> (i32, i32) {
    %c0_i32 = arith.constant 0 : i32
    %c0_i32_0 = arith.constant 0 : i32
    %c0_i32_1 = arith.constant 0 : i32
    return %c0_i32, %c0_i32_0 : i32, i32
  }
  func.func @transform_3(%arg0: i32) -> (i32, i32) {
    %c0_i32 = arith.constant 0 : i32
    %c0_i32_0 = arith.constant 0 : i32
    %c0_i32_1 = arith.constant 0 : i32
    return %c0_i32, %c0_i32_0 : i32, i32
  }
  func.func @transform_4(%arg0: i32) -> (i32, i32) {
    %c0_i32 = arith.constant 0 : i32
    %c0_i32_0 = arith.constant 0 : i32
    %c0_i32_1 = arith.constant 0 : i32
    return %c0_i32, %c0_i32_0 : i32, i32
  }
  func.func @transform_5(%arg0: i32) -> (i32, i32) {
    %c0_i32 = arith.constant 0 : i32
    %c0_i32_0 = arith.constant 0 : i32
    %c0_i32_1 = arith.constant 0 : i32
    return %c0_i32, %c0_i32_0 : i32, i32
  }
  func.func @transform_6(%arg0: i32) -> (i32, i32) {
    %c0_i32 = arith.constant 0 : i32
    %c0_i32_0 = arith.constant 0 : i32
    %c0_i32_1 = arith.constant 0 : i32
    return %c0_i32, %c0_i32_0 : i32, i32
  }
  func.func @transform_7(%arg0: i32) -> (i32, i32) {
    %c0_i32 = arith.constant 0 : i32
    %c0_i32_0 = arith.constant 0 : i32
    %c0_i32_1 = arith.constant 0 : i32
    return %c0_i32, %c0_i32_0 : i32, i32
  }
  func.func @transform_8(%arg0: i32) -> (i32, i32, i32) {
    %c0_i32 = arith.constant 0 : i32
    %c0_i32_0 = arith.constant 0 : i32
    %c0_i32_1 = arith.constant 0 : i32
    return %arg0, %c0_i32, %c0_i32_0 : i32, i32, i32
  }
}

</mosaic_0001>

<llo_original>
// kernel: bottleneck_forward.1
$region0: #{bottleneck_forward.1}
  #allocation0 [shape = 'u32[]', space=smem, size = 0x4, offset = 0x4, fixed_abs, tag = 'smem constant byte address 0x4 - core index']
  #allocation1 [shape = 'u32[72,128]{1,0:T(1,128)}', space=vmem, size = 0x9000, scoped, tag = 'internal scratch']
  %s0 = inlined_call_operand.vmem [shape: f32[2,16,256], index: 0, kind: input, shape index: {}]
  %s1 = inlined_call_operand.vmem [shape: bf16[2,256], index: 1, kind: input, shape index: {}]
  %s2 = inlined_call_operand.vmem [shape: bf16[8,16], index: 2, kind: input, shape index: {}]
  %s3 = inlined_call_operand.vmem [shape: f32[8,1], index: 3, kind: input, shape index: {}]
  %s4 = inlined_call_operand.vmem [shape: bf16[8,72], index: 4, kind: input, shape index: {}]
  %s5 = inlined_call_operand.vmem [shape: f32[8,1], index: 5, kind: input, shape index: {}]
  %s6 = inlined_call_operand.vmem [shape: bf16[32,24], index: 6, kind: input, shape index: {}]
  %s7 = inlined_call_operand.vmem [shape: f32[32,1], index: 7, kind: input, shape index: {}]
  %s8 = inlined_call_operand.vmem [shape: f32[2,32,256], index: 8, kind: output, shape index: {}]
  %s9 = sld [smem:[#allocation0]]
  $region65: #{bottleneck_forward.1} parent=0
    _
  %s11 = ssub.s32 1, %s9
  %s12 = scalar_select 0, %s11, %s9
  loop: start=0, step=1, limit=4
  $region2: #{bottleneck_forward.1} parent=0 // loop_pre_header
    _
  $region3: #{bottleneck_forward.1} parent=0 // loop_header
    %s14 = sphi 0, %s18
    %p15 = scmp.ge.s32.totalorder %s14, 4
    %s24 = sphi 0, %s26
    %s27 = sphi 0, %s24
    %s28 = sphi 0, %s27
    %s44 = sphi 0, %s28
    %s48 = sphi 0, %s48
    %s50 = sphi 0, %s48
    %s51 = sphi 0, %s50
    %s65 = sphi 0, %s51
    %s69 = sphi 0, %s69
    %s71 = sphi 0, %s69
    %s72 = sphi 0, %s71
    %s86 = sphi 0, %s72
    %s90 = sphi 0, %s90
    %s92 = sphi 0, %s90
    %s93 = sphi 0, %s92
    %s107 = sphi 0, %s93
    %s111 = sphi 0, %s111
    %s113 = sphi 0, %s111
    %s114 = sphi 0, %s113
    %s128 = sphi 0, %s114
    %s132 = sphi 0, %s132
    %s134 = sphi 0, %s132
    %s135 = sphi 0, %s134
    %s149 = sphi 0, %s135
    %s153 = sphi 0, %s153
    %s155 = sphi 0, %s153
    %s156 = sphi 0, %s155
    %s170 = sphi 0, %s156
    %s174 = sphi 0, %s174
    %s176 = sphi 0, %s174
    %s177 = sphi 0, %s176
    %s191 = sphi 0, %s177
    %s197 = sphi 0, %s199
    %s200 = sphi 0, %s197
    %s201 = sphi 0, %s200
    %s217 = sphi 0, %s201
  $region4: #{bottleneck_forward.1} parent=0 // loop_header_branch
    %17 = sbr.rel (%p15) target = $region8
  $region5: #{bottleneck_forward.1} parent=0 // loop_body
    %s19 = ssub.s32 %s14, 1
    %s20 = ssub.s32 %s14, 2
    %s21 = sadd.s32 %s14, 1
    %s22 = ssub.s32 %s14, %s21
    %p23 = scmp.eq.s32.totalorder %s22, 0
    %s25 = sadd.s32 %s24, 1
    %s26 = scalar_select %p23, %s24, %s25
    %p29 = pneg %p23
    %p30 = scmp.eq.s32.totalorder %s14, 1
    %p31 = por %p29, %p30
    %p32 = scmp.ne.s32.totalorder %s24, %s27
    %p33 = scmp.eq.s32.totalorder %s14, 0
    %p34 = por %p32, %p33
    %p35 = scmp.ne.s32.totalorder %s24, %s27
    %p36 = scmp.eq.s32.totalorder %s19, 1
    %p37 = por %p35, %p36
    %p38 = scmp.ne.s32.totalorder %s27, %s28
    %p39 = scmp.eq.s32.totalorder %s19, 0
    %p40 = por %p38, %p39
    %p41 = scmp.ne.s32.totalorder %s27, %s28
    %p42 = scmp.eq.s32.totalorder %s20, 1
    %p43 = por %p41, %p42
    %p45 = scmp.ne.s32.totalorder %s28, %s44
    %p46 = scmp.eq.s32.totalorder %s20, 0
    %p47 = por %p45, %p46
    %s49 = sadd.s32 %s48, 1
    %p52 = scmp.eq.s32.totalorder %s14, 1
    %p53 = scmp.ne.s32.totalorder %s48, %s50
    %p54 = scmp.eq.s32.totalorder %s14, 0
    %p55 = por %p53, %p54
    %p56 = scmp.ne.s32.totalorder %s48, %s50
    %p57 = scmp.eq.s32.totalorder %s19, 1
    %p58 = por %p56, %p57
    %p59 = scmp.ne.s32.totalorder %s50, %s51
    %p60 = scmp.eq.s32.totalorder %s19, 0
    %p61 = por %p59, %p60
    %p62 = scmp.ne.s32.totalorder %s50, %s51
    %p63 = scmp.eq.s32.totalorder %s20, 1
    %p64 = por %p62, %p63
    %p66 = scmp.ne.s32.totalorder %s51, %s65
    %p67 = scmp.eq.s32.totalorder %s20, 0
    %p68 = por %p66, %p67
    %s70 = sadd.s32 %s69, 1
    %p73 = scmp.eq.s32.totalorder %s14, 1
    %p74 = scmp.ne.s32.totalorder %s69, %s71
    %p75 = scmp.eq.s32.totalorder %s14, 0
    %p76 = por %p74, %p75
    %p77 = scmp.ne.s32.totalorder %s69, %s71
    %p78 = scmp.eq.s32.totalorder %s19, 1
    %p79 = por %p77, %p78
    %p80 = scmp.ne.s32.totalorder %s71, %s72
    %p81 = scmp.eq.s32.totalorder %s19, 0
    %p82 = por %p80, %p81
    %p83 = scmp.ne.s32.totalorder %s71, %s72
    %p84 = scmp.eq.s32.totalorder %s20, 1
    %p85 = por %p83, %p84
    %p87 = scmp.ne.s32.totalorder %s72, %s86
    %p88 = scmp.eq.s32.totalorder %s20, 0
    %p89 = por %p87, %p88
    %s91 = sadd.s32 %s90, 1
    %p94 = scmp.eq.s32.totalorder %s14, 1
    %p95 = scmp.ne.s32.totalorder %s90, %s92
    %p96 = scmp.eq.s32.totalorder %s14, 0
    %p97 = por %p95, %p96
    %p98 = scmp.ne.s32.totalorder %s90, %s92
    %p99 = scmp.eq.s32.totalorder %s19, 1
    %p100 = por %p98, %p99
    %p101 = scmp.ne.s32.totalorder %s92, %s93
    %p102 = scmp.eq.s32.totalorder %s19, 0
    %p103 = por %p101, %p102
    %p104 = scmp.ne.s32.totalorder %s92, %s93
    %p105 = scmp.eq.s32.totalorder %s20, 1
    %p106 = por %p104, %p105
    %p108 = scmp.ne.s32.totalorder %s93, %s107
    %p109 = scmp.eq.s32.totalorder %s20, 0
    %p110 = por %p108, %p109
    %s112 = sadd.s32 %s111, 1
    %p115 = scmp.eq.s32.totalorder %s14, 1
    %p116 = scmp.ne.s32.totalorder %s111, %s113
    %p117 = scmp.eq.s32.totalorder %s14, 0
    %p118 = por %p116, %p117
    %p119 = scmp.ne.s32.totalorder %s111, %s113
    %p120 = scmp.eq.s32.totalorder %s19, 1
    %p121 = por %p119, %p120
    %p122 = scmp.ne.s32.totalorder %s113, %s114
    %p123 = scmp.eq.s32.totalorder %s19, 0
    %p124 = por %p122, %p123
    %p125 = scmp.ne.s32.totalorder %s113, %s114
    %p126 = scmp.eq.s32.totalorder %s20, 1
    %p127 = por %p125, %p126
    %p129 = scmp.ne.s32.totalorder %s114, %s128
    %p130 = scmp.eq.s32.totalorder %s20, 0
    %p131 = por %p129, %p130
    %s133 = sadd.s32 %s132, 1
    %p136 = scmp.eq.s32.totalorder %s14, 1
    %p137 = scmp.ne.s32.totalorder %s132, %s134
    %p138 = scmp.eq.s32.totalorder %s14, 0
    %p139 = por %p137, %p138
    %p140 = scmp.ne.s32.totalorder %s132, %s134
    %p141 = scmp.eq.s32.totalorder %s19, 1
    %p142 = por %p140, %p141
    %p143 = scmp.ne.s32.totalorder %s134, %s135
    %p144 = scmp.eq.s32.totalorder %s19, 0
    %p145 = por %p143, %p144
    %p146 = scmp.ne.s32.totalorder %s134, %s135
    %p147 = scmp.eq.s32.totalorder %s20, 1
    %p148 = por %p146, %p147
    %p150 = scmp.ne.s32.totalorder %s135, %s149
    %p151 = scmp.eq.s32.totalorder %s20, 0
    %p152 = por %p150, %p151
    %s154 = sadd.s32 %s153, 1
    %p157 = scmp.eq.s32.totalorder %s14, 1
    %p158 = scmp.ne.s32.totalorder %s153, %s155
    %p159 = scmp.eq.s32.totalorder %s14, 0
    %p160 = por %p158, %p159
    %p161 = scmp.ne.s32.totalorder %s153, %s155
    %p162 = scmp.eq.s32.totalorder %s19, 1
    %p163 = por %p161, %p162
    %p164 = scmp.ne.s32.totalorder %s155, %s156
    %p165 = scmp.eq.s32.totalorder %s19, 0
    %p166 = por %p164, %p165
    %p167 = scmp.ne.s32.totalorder %s155, %s156
    %p168 = scmp.eq.s32.totalorder %s20, 1
    %p169 = por %p167, %p168
    %p171 = scmp.ne.s32.totalorder %s156, %s170
    %p172 = scmp.eq.s32.totalorder %s20, 0
    %p173 = por %p171, %p172
    %s175 = sadd.s32 %s174, 1
    %p178 = scmp.eq.s32.totalorder %s14, 1
    %p179 = scmp.ne.s32.totalorder %s174, %s176
    %p180 = scmp.eq.s32.totalorder %s14, 0
    %p181 = por %p179, %p180
    %p182 = scmp.ne.s32.totalorder %s174, %s176
    %p183 = scmp.eq.s32.totalorder %s19, 1
    %p184 = por %p182, %p183
    %p185 = scmp.ne.s32.totalorder %s176, %s177
    %p186 = scmp.eq.s32.totalorder %s19, 0
    %p187 = por %p185, %p186
    %p188 = scmp.ne.s32.totalorder %s176, %s177
    %p189 = scmp.eq.s32.totalorder %s20, 1
    %p190 = por %p188, %p189
    %p192 = scmp.ne.s32.totalorder %s177, %s191
    %p193 = scmp.eq.s32.totalorder %s20, 0
    %p194 = por %p192, %p193
    %s195 = ssub.s32 %s14, %s21
    %p196 = scmp.eq.s32.totalorder %s195, 0
    %s198 = sadd.s32 %s197, 1
    %s199 = scalar_select %p196, %s197, %s198
    %p202 = pneg %p196
    %p203 = scmp.eq.s32.totalorder %s14, 1
    %p204 = por %p202, %p203
    %p205 = scmp.ne.s32.totalorder %s197, %s200
    %p206 = scmp.eq.s32.totalorder %s14, 0
    %p207 = por %p205, %p206
    %p208 = scmp.ne.s32.totalorder %s197, %s200
    %p209 = scmp.eq.s32.totalorder %s19, 1
    %p210 = por %p208, %p209
    %p211 = scmp.ne.s32.totalorder %s200, %s201
    %p212 = scmp.eq.s32.totalorder %s19, 0
    %p213 = por %p211, %p212
    %p214 = scmp.ne.s32.totalorder %s200, %s201
    %p215 = scmp.eq.s32.totalorder %s20, 1
    %p216 = por %p214, %p215
    %p218 = scmp.ne.s32.totalorder %s201, %s217
    %p219 = scmp.eq.s32.totalorder %s20, 0
    %p220 = por %p218, %p219
    %p221 = scmp.le.s32.totalorder 1, %s14
    %p222 = scmp.lt.s32.totalorder %s14, 3
    %p223 = pnand %p221, %p222
    %p224 = pneg %p223
    // Predicated region
    $region9: #{bottleneck_forward.1} parent=5 // pred_check
      _
    $region10: #{bottleneck_forward.1} parent=5 // pred_check_branch
      %226 = sbr.rel (%p223) target = $region12
    $region11: #{bottleneck_forward.1} parent=5 // pred_region
      %s227 = ssub.s32 %s14, 1
      // Predicated region
      $region13: #{bottleneck_forward.1} parent=11 // pred_check
        %p228 = pneg %p61
      $region14: #{bottleneck_forward.1} parent=11 // pred_check_branch
        %230 = sbr.rel (%p228) target = $region16
      $region15: #{bottleneck_forward.1} parent=11 // pred_region
        _
      $region16: #{bottleneck_forward.1} parent=11 // pred_fallthru
        _
      // Predicated region
      $region17: #{bottleneck_forward.1} parent=11 // pred_check
        %p231 = pneg %p82
      $region18: #{bottleneck_forward.1} parent=11 // pred_check_branch
        %233 = sbr.rel (%p231) target = $region20
      $region19: #{bottleneck_forward.1} parent=11 // pred_region
        _
      $region20: #{bottleneck_forward.1} parent=11 // pred_fallthru
        _
      // Predicated region
      $region21: #{bottleneck_forward.1} parent=11 // pred_check
        %p234 = pneg %p103
      $region22: #{bottleneck_forward.1} parent=11 // pred_check_branch
        %236 = sbr.rel (%p234) target = $region24
      $region23: #{bottleneck_forward.1} parent=11 // pred_region
        _
      $region24: #{bottleneck_forward.1} parent=11 // pred_fallthru
        _
      // Predicated region
      $region25: #{bottleneck_forward.1} parent=11 // pred_check
        %p237 = pneg %p124
      $region26: #{bottleneck_forward.1} parent=11 // pred_check_branch
        %239 = sbr.rel (%p237) target = $region28
      $region27: #{bottleneck_forward.1} parent=11 // pred_region
        _
      $region28: #{bottleneck_forward.1} parent=11 // pred_fallthru
        _
      // Predicated region
      $region29: #{bottleneck_forward.1} parent=11 // pred_check
        %p240 = pneg %p145
      $region30: #{bottleneck_forward.1} parent=11 // pred_check_branch
        %242 = sbr.rel (%p240) target = $region32
      $region31: #{bottleneck_forward.1} parent=11 // pred_region
        _
      $region32: #{bottleneck_forward.1} parent=11 // pred_fallthru
        _
      // Predicated region
      $region33: #{bottleneck_forward.1} parent=11 // pred_check
        %p243 = pneg %p166
      $region34: #{bottleneck_forward.1} parent=11 // pred_check_branch
        %245 = sbr.rel (%p243) target = $region36
      $region35: #{bottleneck_forward.1} parent=11 // pred_region
        _
      $region36: #{bottleneck_forward.1} parent=11 // pred_fallthru
        _
      // Predicated region
      $region37: #{bottleneck_forward.1} parent=11 // pred_check
        %p246 = pneg %p187
      $region38: #{bottleneck_forward.1} parent=11 // pred_check_branch
        %248 = sbr.rel (%p246) target = $region40
      $region39: #{bottleneck_forward.1} parent=11 // pred_region
        _
      $region40: #{bottleneck_forward.1} parent=11 // pred_fallthru
        _
    $region12: #{bottleneck_forward.1} parent=5 // pred_fallthru
      _
    %p249 = scmp.lt.s32.totalorder %s14, 2
    // Predicated region
    $region41: #{bottleneck_forward.1} parent=5 // pred_check
      %p250 = pneg %p249
    $region42: #{bottleneck_forward.1} parent=5 // pred_check_branch
      %252 = sbr.rel (%p250) target = $region44
    $region43: #{bottleneck_forward.1} parent=5 // pred_region
      // Predicated region
      $region45: #{bottleneck_forward.1} parent=43 // pred_check
        %p253 = pneg %p34
      $region46: #{bottleneck_forward.1} parent=43 // pred_check_branch
        %255 = sbr.rel (%p253) target = $region48
      $region47: #{bottleneck_forward.1} parent=43 // pred_region
        %p256 = scmp.lt.s32.totalorder %s14, 1
        %s257 = scalar_select %p256, %s14, 1
        %s258 = smul.addr %s257, 4
        %s259 = smul.addr %s258, 8
        %s260 = scalar_lea.vmem %s0, %s259
      $region48: #{bottleneck_forward.1} parent=43 // pred_fallthru
        _
    $region44: #{bottleneck_forward.1} parent=5 // pred_fallthru
      _
    %p261 = scmp.le.s32.totalorder 1, %s14
    %p262 = scmp.lt.s32.totalorder %s14, 3
    %p263 = pnand %p261, %p262
    %p264 = pneg %p263
    // Predicated region
    $region49: #{bottleneck_forward.1} parent=5 // pred_check
      _
    $region50: #{bottleneck_forward.1} parent=5 // pred_check_branch
      %266 = sbr.rel (%p263) target = $region52
    $region51: #{bottleneck_forward.1} parent=5 // pred_region
      %s267 = ssub.s32 %s14, 1
      %p268 = scmp.lt.s32.totalorder %s19, 1
      %s269 = scalar_select %p268, %s19, 1
      %s270 = smul.addr %s269, 4
      %s271 = smul.addr %s270, 8
      %s272 = scalar_lea.vmem %s0, %s271
      %p273 = pneg %p40
      %p274 = pneg %p37
      %p275 = pneg %p61
      %p276 = pneg %p58
      %p277 = pneg %p82
      %p278 = pneg %p79
      %p279 = pneg %p103
      %p280 = pneg %p100
      %p281 = pneg %p124
      %p282 = pneg %p121
      %p283 = pneg %p145
      %p284 = pneg %p142
      %p285 = pneg %p166
      %p286 = pneg %p163
      %p287 = pneg %p187
      %p288 = pneg %p184
      %p289 = pneg %p213
      %p290 = pneg %p210
      %p291 = scmp.lt.s32.totalorder %s19, 1
      %s292 = scalar_select %p291, %s19, 1
      %s293 = smul.addr %s292, 8
      %s294 = smul.addr %s293, 8
      %s295 = scalar_lea.vmem %s8, %s294
      %p296 = scmp.lt.s32.totalorder %s19, 1
      %s297 = scalar_select %p296, %s19, 1
      %s298 = smul.addr %s297, 4
      %s299 = smul.addr %s298, 8
      %s300 = scalar_lea.vmem %s0, %s299
      %p301 = scmp.lt.s32.totalorder %s19, 1
      %s302 = scalar_select %p301, %s19, 1
      %s303 = smul.addr %s302, 8
      %s304 = smul.addr %s303, 8
      %s305 = scalar_lea.vmem %s8, %s304
      %v307 = vld [vmem:[%s300] sm:$0xff]
      %v308 = vld [vmem:[%s300 + $0x8] sm:$0xff]
      %v309 = vld [vmem:[%s300 + $0x10] sm:$0xff]
      %v310 = vld [vmem:[%s300 + $0x18] sm:$0xff]
      %v311 = vpack.c.bf16 %v309, %v307
      %v312 = vpack.c.bf16 %v310, %v308
      %v313 = vld [vmem:[%s2] sm:$0xf]
      %v314 = vld [vmem:[%s3] sm:$0xff]
      %316 = vset.pattern.permute.xlu0 0
      %317 = vperm.xlu0 %316, %v314
      %v318 = vpop.permute.xlu0 %317
      %vm320 = vcmask 130048
      %v322 = vsel %vm320, %v313, 0
      %324 = vmatpush.bf16.msra.mxu0 0
      %325 = vmatpush.bf16.msra.mxu0 0
      %326 = vmatpush.bf16.msra.mxu0 0
      %327 = vmatpush.bf16.msra.mxu0 0
      %328 = vmatpush.bf16.msra.mxu0 0
      %329 = vmatpush.bf16.msra.mxu0 0
      %330 = vmatpush.bf16.msra.mxu0 0
      %331 = vmatpush.bf16.msra.mxu0 %v311
      %332 = vmatmul.bf16.gmra.mxu0 %v322
      %v333 = vpop.f32.mrf.mxu0
      %v334 = vadd.f32 %v318, %v333
      %v335 = vpop.f32.mrf.mxu0
      %336 = vdwg.mxu0
      %337 = vmatpush.bf16.msra.mxu0 0
      %338 = vmatpush.bf16.msra.mxu0 0
      %339 = vmatpush.bf16.msra.mxu0 0
      %340 = vmatpush.bf16.msra.mxu0 0
      %341 = vmatpush.bf16.msra.mxu0 0
      %342 = vmatpush.bf16.msra.mxu0 0
      %343 = vmatpush.bf16.msra.mxu0 0
      %344 = vmatpush.bf16.msra.mxu0 %v312
      %345 = vmatmul.bf16.gmra.mxu0 %v322
      %v346 = vpop.f32.mrf.mxu0
      %v347 = vadd.f32 %v318, %v346
      %v348 = vpop.f32.mrf.mxu0
      %349 = vdwg.mxu0
      %v350 = vmax.f32 %v334, 0.0
      %v351 = vmax.f32 %v347, 0.0
      %v352 = vpack.c.bf16 %v351, %v350
      %v353 = vld [vmem:[%s1] sm:$0x3]
      %355 = vst [vmem:[#allocation1] ss:$9 sm:$0xff] %v353
      %v356 = vld [vmem:[#allocation1] sm:$0xff]
      %v357 = vld [vmem:[#allocation1 + $0x9] sm:$0xff]
      %v358 = vpack.i.b16 %v356, %v356
      %v360 = vperm.slane %v358, 0
      %v361 = vpack.i.b16 %v357, %v357
      %v363 = vperm.slane %v361, 0
      %v364 = vunpack.c.l.bf16 %v352
      %v365 = vunpack.c.h.bf16 %v352
      %v366 = vunpack.c.l.bf16 %v360
      %v367 = vunpack.c.l.bf16 %v363
      %v368 = vmul.f32 %v364, %v366
      %v369 = vmul.f32 %v365, %v367
      %v370 = vpack.c.bf16 %v369, %v368
      %371 = vst [vmem:[#allocation1] ss:$9 sm:$0xff] %v353
      %v372 = vld [vmem:[#allocation1] sm:$0xff]
      %v373 = vld [vmem:[#allocation1 + $0x9] sm:$0xff]
      %v374 = vshrl.u32 %v372, 16
      %v375 = vpack.i.b16 %v374, %v374
      %v377 = vperm.slane %v375, 0
      %v378 = vshrl.u32 %v373, 16
      %v379 = vpack.i.b16 %v378, %v378
      %v381 = vperm.slane %v379, 0
      %v382 = vunpack.c.l.bf16 %v377
      %v383 = vunpack.c.l.bf16 %v381
      %v384 = vmul.f32 %v364, %v382
      %v385 = vmul.f32 %v365, %v383
      %v386 = vpack.c.bf16 %v385, %v384
      %v388 = vunpack.c.l.b16 %v370
      %v389 = vunpack.c.h.b16 %v370
      %v390 = vpack.c.b16 %v388, %v388
      %v391 = vpack.c.b16 %v389, %v389
      %392 = vrot.lane.b32.xlu0 %v390, 17
      %v393 = vpop.permute.xlu0 %392
      %394 = vrot.lane.b32.xlu0 %v391, 17
      %v395 = vpop.permute.xlu0 %394
      %vm396 = vcmask 138240
      %v397 = vsel %vm396, %v393, %v395
      %vm398 = vcmask 138240
      %v401 = vsel %vm398, 0, %v393
      %v403 = vsel %vm398, %v395, 0
      %v405 = vunpack.c.l.b16 %v352
      %v406 = vunpack.c.h.b16 %v352
      %v407 = vpack.c.b16 %v405, %v405
      %v408 = vpack.c.b16 %v406, %v406
      %409 = vrot.lane.b32.xlu0 %v407, 17
      %v410 = vpop.permute.xlu0 %409
      %411 = vrot.lane.b32.xlu0 %v408, 17
      %v412 = vpop.permute.xlu0 %411
      %v413 = vsel %vm396, %v410, %v412
      %v415 = vsel %vm398, 0, %v410
      %v417 = vsel %vm398, %v412, 0
      %v419 = vunpack.c.l.b16 %v386
      %v420 = vunpack.c.h.b16 %v386
      %v421 = vpack.c.b16 %v419, %v419
      %v422 = vpack.c.b16 %v420, %v420
      %423 = vrot.lane.b32.xlu0 %v421, 17
      %v424 = vpop.permute.xlu0 %423
      %425 = vrot.lane.b32.xlu0 %v422, 17
      %v426 = vpop.permute.xlu0 %425
      %v427 = vsel %vm396, %v424, %v426
      %v429 = vsel %vm398, 0, %v424
      %v431 = vsel %vm398, %v426, 0
      %v434 = vrot.slane %v415, 4
      %v435 = vrot.slane %v413, 4
      %v436 = vrot.slane %v417, 4
      %437 = vrot.lane.b32.xlu0 %v434, 127
      %v438 = vpop.permute.xlu0 %437
      %439 = vrot.lane.b32.xlu0 %v435, 127
      %v440 = vpop.permute.xlu0 %439
      %441 = vrot.lane.b32.xlu0 %v436, 127
      %v442 = vpop.permute.xlu0 %441
      %vm443 = vcmask 1039360
      %v444 = vsel %vm443, %v438, %v440
      %v445 = vsel %vm443, %v440, %v442
      %448 = vrot.lane.b32.xlu0 %v429, 126
      %v449 = vpop.permute.xlu0 %448
      %450 = vrot.lane.b32.xlu0 %v427, 126
      %v451 = vpop.permute.xlu0 %450
      %452 = vrot.lane.b32.xlu0 %v431, 126
      %v453 = vpop.permute.xlu0 %452
      %vm454 = vcmask 1031168
      %v455 = vsel %vm454, %v449, %v451
      %v456 = vsel %vm454, %v451, %v453
      %v459 = vrot.slane %v401, 4
      %v460 = vrot.slane %v397, 4
      %v461 = vrot.slane %v403, 4
      %462 = vrot.lane.b32.xlu0 %v459, 112
      %v463 = vpop.permute.xlu0 %462
      %464 = vrot.lane.b32.xlu0 %v460, 112
      %v465 = vpop.permute.xlu0 %464
      %466 = vrot.lane.b32.xlu0 %v461, 112
      %v467 = vpop.permute.xlu0 %466
      %vm468 = vcmask 916480
      %v469 = vsel %vm468, %v463, %v465
      %v470 = vsel %vm468, %v465, %v467
      %471 = vrot.lane.b32.xlu0 %v415, 111
      %v472 = vpop.permute.xlu0 %471
      %473 = vrot.lane.b32.xlu0 %v413, 111
      %v474 = vpop.permute.xlu0 %473
      %475 = vrot.lane.b32.xlu0 %v417, 111
      %v476 = vpop.permute.xlu0 %475
      %vm477 = vcmask 908288
      %v478 = vsel %vm477, %v472, %v474
      %v479 = vsel %vm477, %v474, %v476
      %v480 = vrot.slane %v429, 4
      %v481 = vrot.slane %v427, 4
      %v482 = vrot.slane %v431, 4
      %483 = vrot.lane.b32.xlu0 %v480, 110
      %v484 = vpop.permute.xlu0 %483
      %485 = vrot.lane.b32.xlu0 %v481, 110
      %v486 = vpop.permute.xlu0 %485
      %487 = vrot.lane.b32.xlu0 %v482, 110
      %v488 = vpop.permute.xlu0 %487
      %vm489 = vcmask 900096
      %v490 = vsel %vm489, %v484, %v486
      %v491 = vsel %vm489, %v486, %v488
      %492 = vrot.lane.b32.xlu0 %v401, 96
      %v493 = vpop.permute.xlu0 %492
      %494 = vrot.lane.b32.xlu0 %v397, 96
      %v495 = vpop.permute.xlu0 %494
      %496 = vrot.lane.b32.xlu0 %v403, 96
      %v497 = vpop.permute.xlu0 %496
      %vm498 = vcmask 785408
      %v499 = vsel %vm498, %v493, %v495
      %v500 = vsel %vm498, %v495, %v497
      %501 = vrot.lane.b32.xlu0 %v434, 95
      %v502 = vpop.permute.xlu0 %501
      %503 = vrot.lane.b32.xlu0 %v435, 95
      %v504 = vpop.permute.xlu0 %503
      %505 = vrot.lane.b32.xlu0 %v436, 95
      %v506 = vpop.permute.xlu0 %505
      %vm507 = vcmask 777216
      %v508 = vsel %vm507, %v502, %v504
      %v509 = vsel %vm507, %v504, %v506
      %510 = vrot.lane.b32.xlu0 %v429, 94
      %v511 = vpop.permute.xlu0 %510
      %512 = vrot.lane.b32.xlu0 %v427, 94
      %v513 = vpop.permute.xlu0 %512
      %514 = vrot.lane.b32.xlu0 %v431, 94
      %v515 = vpop.permute.xlu0 %514
      %vm516 = vcmask 769024
      %v517 = vsel %vm516, %v511, %v513
      %v518 = vsel %vm516, %v513, %v515
      %vm519 = vcmask 1043456
      %v521 = vsel %vm519, %v401, %v444
      %v525 = vsel %vm519, %v397, %v445
      %v529 = vsel %vm519, %v455, %v469
      %v533 = vsel %vm519, %v456, %v470
      %v537 = vsel %vm519, %v478, %v490
      %v541 = vsel %vm519, %v479, %v491
      %v545 = vsel %vm519, %v499, %v508
      %v549 = vsel %vm519, %v500, %v509
      %v551 = vld [vmem:[%s4] sm:$0xf]
      %v552 = vld [vmem:[%s5] sm:$0xff]
      %554 = vset.pattern.permute.xlu0 0
      %555 = vperm.xlu0 %554, %v552
      %v556 = vpop.permute.xlu0 %555
      %vm558 = vcmask 588800
      %v560 = vsel %vm558, %v551, 0
      %v563 = vsel %vm519, %v517, 0
      %v566 = vsel %vm519, %v518, 0
      %568 = vmatpush.bf16.msra.mxu0 0
      %569 = vmatpush.bf16.msra.mxu0 0
      %570 = vmatpush.bf16.msra.mxu0 0
      %571 = vmatpush.bf16.msra.mxu0 %v563
      %572 = vmatpush.bf16.msra.mxu0 %v545
      %573 = vmatpush.bf16.msra.mxu0 %v537
      %574 = vmatpush.bf16.msra.mxu0 %v529
      %575 = vmatpush.bf16.msra.mxu0 %v521
      %576 = vmatmul.bf16.gmra.mxu0 %v560
      %v577 = vpop.f32.mrf.mxu0
      %v578 = vadd.f32 %v556, %v577
      %v579 = vpop.f32.mrf.mxu0
      %580 = vdwg.mxu0
      %581 = vmatpush.bf16.msra.mxu0 0
      %582 = vmatpush.bf16.msra.mxu0 0
      %583 = vmatpush.bf16.msra.mxu0 0
      %584 = vmatpush.bf16.msra.mxu0 %v566
      %585 = vmatpush.bf16.msra.mxu0 %v549
      %586 = vmatpush.bf16.msra.mxu0 %v541
      %587 = vmatpush.bf16.msra.mxu0 %v533
      %588 = vmatpush.bf16.msra.mxu0 %v525
      %589 = vmatmul.bf16.gmra.mxu0 %v560
      %v590 = vpop.f32.mrf.mxu0
      %v591 = vadd.f32 %v556, %v590
      %v592 = vpop.f32.mrf.mxu0
      %593 = vdwg.mxu0
      %v594 = vmax.f32 %v578, 0.0
      %v595 = vmax.f32 %v591, 0.0
      %v596 = vpack.c.bf16 %v307, %v594
      %v597 = vpack.c.bf16 %v308, %v595
      %v598 = vpack.c.bf16 %v309, %v309
      %v599 = vpack.c.bf16 %v310, %v310
      %v600 = vld [vmem:[%s6] sm:$0xf]
      %v601 = vld [vmem:[%s6 + $0x4] sm:$0xf]
      %v602 = vld [vmem:[%s6 + $0x8] sm:$0xf]
      %v603 = vld [vmem:[%s6 + $0xc] sm:$0xf]
      %v604 = vld [vmem:[%s7] sm:$0xff]
      %v605 = vld [vmem:[%s7 + $0x8] sm:$0xff]
      %v606 = vld [vmem:[%s7 + $0x10] sm:$0xff]
      %v607 = vld [vmem:[%s7 + $0x18] sm:$0xff]
      %609 = vset.pattern.permute.xlu0 0
      %610 = vperm.xlu0 %609, %v604
      %v611 = vpop.permute.xlu0 %610
      %614 = vset.pattern.permute.xlu0 0
      %615 = vperm.xlu0 %614, %v605
      %v616 = vpop.permute.xlu0 %615
      %619 = vset.pattern.permute.xlu0 0
      %620 = vperm.xlu0 %619, %v606
      %v621 = vpop.permute.xlu0 %620
      %624 = vset.pattern.permute.xlu0 0
      %625 = vperm.xlu0 %624, %v607
      %v626 = vpop.permute.xlu0 %625
      %v632 = vunpack.c.l.b16 %v600
      %v633 = vunpack.c.l.b16 %v601
      %v634 = vunpack.c.l.b16 %v602
      %v635 = vunpack.c.l.b16 %v603
      %v636 = vpack.c.b16 %v633, %v632
      %v637 = vpack.c.b16 %v635, %v634
      %vm638 = vcmask 195584
      %v640 = vsel %vm638, %v636, 0
      %v643 = vsel %vm638, %v637, 0
      %v646 = vsel %vm519, %v598, 0
      %v649 = vsel %vm519, %v599, 0
      %651 = vmatpush.bf16.msra.mxu0 0
      %652 = vmatpush.bf16.msra.mxu0 0
      %653 = vmatpush.bf16.msra.mxu0 0
      %654 = vmatpush.bf16.msra.mxu0 0
      %655 = vmatpush.bf16.msra.mxu0 0
      %656 = vmatpush.bf16.msra.mxu0 0
      %657 = vmatpush.bf16.msra.mxu0 %v646
      %658 = vmatpush.bf16.msra.mxu0 %v596
      %659 = vmatmul.bf16.gmra.mxu0 %v640
      %v660 = vpop.f32.mrf.mxu0
      %v661 = vadd.f32 %v611, %v660
      %v662 = vpop.f32.mrf.mxu0
      %v663 = vadd.f32 %v616, %v662
      %664 = vmatmul.bf16.gmra.mxu0 %v643
      %v665 = vpop.f32.mrf.mxu0
      %v666 = vadd.f32 %v621, %v665
      %v667 = vpop.f32.mrf.mxu0
      %v668 = vadd.f32 %v626, %v667
      %669 = vdwg.mxu0
      %670 = vmatpush.bf16.msra.mxu0 0
      %671 = vmatpush.bf16.msra.mxu0 0
      %672 = vmatpush.bf16.msra.mxu0 0
      %673 = vmatpush.bf16.msra.mxu0 0
      %674 = vmatpush.bf16.msra.mxu0 0
      %675 = vmatpush.bf16.msra.mxu0 0
      %676 = vmatpush.bf16.msra.mxu0 %v649
      %677 = vmatpush.bf16.msra.mxu0 %v597
      %678 = vmatmul.bf16.gmra.mxu0 %v640
      %v679 = vpop.f32.mrf.mxu0
      %v680 = vadd.f32 %v611, %v679
      %v681 = vpop.f32.mrf.mxu0
      %v682 = vadd.f32 %v616, %v681
      %683 = vmatmul.bf16.gmra.mxu0 %v643
      %v684 = vpop.f32.mrf.mxu0
      %v685 = vadd.f32 %v621, %v684
      %v686 = vpop.f32.mrf.mxu0
      %v687 = vadd.f32 %v626, %v686
      %688 = vdwg.mxu0
      %v689 = vmax.f32 %v661, 0.0
      %v690 = vmax.f32 %v680, 0.0
      %v691 = vmax.f32 %v663, 0.0
      %v692 = vmax.f32 %v682, 0.0
      %v693 = vmax.f32 %v666, 0.0
      %v694 = vmax.f32 %v685, 0.0
      %v695 = vmax.f32 %v668, 0.0
      %v696 = vmax.f32 %v687, 0.0
      %697 = vst [vmem:[%s305] sm:$0xff] %v689
      %698 = vst [vmem:[%s305 + $0x8] sm:$0xff] %v690
      %699 = vst [vmem:[%s305 + $0x10] sm:$0xff] %v691
      %700 = vst [vmem:[%s305 + $0x18] sm:$0xff] %v692
      %701 = vst [vmem:[%s305 + $0x20] sm:$0xff] %v693
      %702 = vst [vmem:[%s305 + $0x28] sm:$0xff] %v694
      %703 = vst [vmem:[%s305 + $0x30] sm:$0xff] %v695
      %704 = vst [vmem:[%s305 + $0x38] sm:$0xff] %v696
      %p705 = scmp.lt.s32.totalorder %s19, 1
      %s706 = scalar_select %p705, %s19, 1
      %s707 = smul.addr %s706, 8
      %s708 = smul.addr %s707, 8
      %s709 = scalar_lea.vmem %s8, %s708
      // Predicated region
      $region53: #{bottleneck_forward.1} parent=51 // pred_check
        %p710 = pneg %p210
      $region54: #{bottleneck_forward.1} parent=51 // pred_check_branch
        %712 = sbr.rel (%p710) target = $region56
      $region55: #{bottleneck_forward.1} parent=51 // pred_region
        _
      $region56: #{bottleneck_forward.1} parent=51 // pred_fallthru
        _
    $region52: #{bottleneck_forward.1} parent=5 // pred_fallthru
      _
    %p713 = scmp.le.s32.totalorder 2, %s14
    // Predicated region
    $region57: #{bottleneck_forward.1} parent=5 // pred_check
      %p714 = pneg %p713
    $region58: #{bottleneck_forward.1} parent=5 // pred_check_branch
      %716 = sbr.rel (%p714) target = $region60
    $region59: #{bottleneck_forward.1} parent=5 // pred_region
      %s717 = ssub.s32 %s14, 2
      // Predicated region
      $region61: #{bottleneck_forward.1} parent=59 // pred_check
        %p718 = pneg %p216
      $region62: #{bottleneck_forward.1} parent=59 // pred_check_branch
        %720 = sbr.rel (%p718) target = $region64
      $region63: #{bottleneck_forward.1} parent=59 // pred_region
        %p721 = scmp.lt.s32.totalorder %s20, 1
        %s722 = scalar_select %p721, %s20, 1
        %s723 = smul.addr %s722, 8
        %s724 = smul.addr %s723, 8
        %s725 = scalar_lea.vmem %s8, %s724
      $region64: #{bottleneck_forward.1} parent=59 // pred_fallthru
        _
    $region60: #{bottleneck_forward.1} parent=5 // pred_fallthru
      _
  $region6: #{bottleneck_forward.1} parent=0 // loop_footer
    %s18 = sadd.s32 1, %s14
  $region7: #{bottleneck_forward.1} parent=0 // loop_footer_branch
    %13 = sbr.rel target = $region3
  $region8: #{bottleneck_forward.1} parent=0 // loop_exit
    _

</llo_original>
